<compile_context>
chip_gen: v7x
topology: tpu7x:2x2x1
jax: 0.10.0
libtpu: 0.0.40
codegen_flags: <defaults>
</compile_context>

<pallas_src>
import math
import functools

import jax
import jax.numpy as jnp
from jax import lax
from jax.experimental import pallas as pl
from jax.experimental.pallas import tpu as pltpu

_VMEM_LIMIT = 64 * 1024 * 1024  # raise scoped VMEM limit (safe on v5e/v6e/v7x; usage is tiny)


# ---------------------------------------------------------------------------
# Projection kernels
# ---------------------------------------------------------------------------
def _qkv_proj_kernel(xq_ref, xk_ref, xv_ref, wq_ref, wk_ref, wv_ref, b_ref, o_ref):
    # Three projections in one kernel -> one lane-dense (tm, 3D) output slab.
    yq = jnp.dot(xq_ref[...], wq_ref[...], preferred_element_type=jnp.float32)
    yk = jnp.dot(xk_ref[...], wk_ref[...], preferred_element_type=jnp.float32)
    yv = jnp.dot(xv_ref[...], wv_ref[...], preferred_element_type=jnp.float32)
    o_ref[...] = (jnp.concatenate([yq, yk, yv], axis=-1) + b_ref[...]).astype(o_ref.dtype)


def pallas_qkv_proj(xq, xk, xv, wq, wk, wv, bq, bk, bv, *, tile_m=256):
    """qkv = [xq@wq+bq | xk@wk+bk | xv@wv+bv], row-tiled. Shapes: x (N,D), w (D,D)."""
    N, D = xq.shape
    tm = N if N <= tile_m else tile_m
    b_cat = jnp.concatenate([bq, bk, bv], axis=0).reshape(1, 3 * D)
    return pl.pallas_call(
        _qkv_proj_kernel,
        out_shape=jax.ShapeDtypeStruct((N, 3 * D), xq.dtype),
        grid=(pl.cdiv(N, tm),),
        in_specs=[
            pl.BlockSpec((tm, D), lambda i: (i, 0)),
            pl.BlockSpec((tm, D), lambda i: (i, 0)),
            pl.BlockSpec((tm, D), lambda i: (i, 0)),
            pl.BlockSpec((D, D), lambda i: (0, 0)),
            pl.BlockSpec((D, D), lambda i: (0, 0)),
            pl.BlockSpec((D, D), lambda i: (0, 0)),
            pl.BlockSpec((1, 3 * D), lambda i: (0, 0)),
        ],
        out_specs=pl.BlockSpec((tm, 3 * D), lambda i: (i, 0)),
        compiler_params=pltpu.CompilerParams(
            dimension_semantics=("parallel",),
            vmem_limit_bytes=_VMEM_LIMIT,
        ),
    )(xq, xk, xv, wq, wk, wv, b_cat)


def _linear_kernel(x_ref, w_ref, b_ref, o_ref):
    o_ref[...] = (
        jnp.dot(x_ref[...], w_ref[...], preferred_element_type=jnp.float32) + b_ref[...]
    ).astype(o_ref.dtype)


def pallas_linear(x2d, w, b, *, tile_m=256):
    """y = x @ w + b, row-tiled so large B*S stays VMEM-safe."""
    N, Din = x2d.shape
    Dout = w.shape[1]
    tm = N if N <= tile_m else tile_m
    return pl.pallas_call(
        _linear_kernel,
        out_shape=jax.ShapeDtypeStruct((N, Dout), x2d.dtype),
        grid=(pl.cdiv(N, tm),),
        in_specs=[
            pl.BlockSpec((tm, Din), lambda i: (i, 0)),
            pl.BlockSpec((Din, Dout), lambda i: (0, 0)),
            pl.BlockSpec((1, Dout), lambda i: (0, 0)),
        ],
        out_specs=pl.BlockSpec((tm, Dout), lambda i: (i, 0)),
        compiler_params=pltpu.CompilerParams(
            dimension_semantics=("parallel",),
            vmem_limit_bytes=_VMEM_LIMIT,
        ),
    )(x2d, w, b.reshape(1, Dout))


# ---------------------------------------------------------------------------
# AKT distance-decayed attention kernel: one batch row per grid step, all heads
# ---------------------------------------------------------------------------
def _akt_attention_kernel(qkv_ref, keep_ref, bias_ref, pos_ref, tri_ref, gamma_ref,
                          o_ref, *, n_heads, d_k, scale, zero_pad):
    D = n_heads * d_k
    slab = qkv_ref[0]                   # (S, 3D) in input dtype: [q | k | v]
    S = slab.shape[0]
    keep = keep_ref[...]                # (S, S) f32 {0,1}
    bias = bias_ref[...]                # (S, S) f32 {0, -1e32} additive mask
    pos = pos_ref[...]                  # (S, S) f32 |j - i|
    tri = tri_ref[...]                  # (S, S) bf16, tri[l, j] = (l > j)

    def msoftmax(s):                    # s already has the additive mask bias folded in
        m = jnp.max(s, axis=-1, keepdims=True)
        e = jnp.exp(s - m)
        return e * pl.reciprocal(jnp.sum(e, axis=-1, keepdims=True), approx=True)

    # Static per-head loop (H is small); all (S,S) constants are shared across heads and
    # the output is written as one lane-dense (S, D) slab.
    outs = []
    for h in range(n_heads):
        q = slab[:, h * d_k:(h + 1) * d_k]
        k = slab[:, D + h * d_k:D + (h + 1) * d_k]
        v = slab[:, 2 * D + h * d_k:2 * D + (h + 1) * d_k]
        g = gamma_ref[h]                # scalar -softplus(gamma_h), read from SMEM

        # QK^T: contract the last dims directly (no explicit transpose of K).
        scores = lax.dot_general(
            q, k, (((1,), (1,)), ((), ())),
            preferred_element_type=jnp.float32) * scale          # (S, S) f32

        # "no_grad" branch of the reference: masked softmax, re-masked.
        scores_ = msoftmax(scores + bias) * keep

        # remaining[i, j] = sum_{l > j} scores_[i, l]  (== disttotal - distcum)
        # bf16 MXU operands with f32 accumulation (probabilities in [0,1]; tri is exact).
        remaining = lax.dot_general(
            scores_.astype(jnp.bfloat16), tri, (((1,), (0,)), ((), ())),
            preferred_element_type=jnp.float32)
        dist = jnp.sqrt(jnp.maximum(remaining * pos, 0.0))
        total_effect = jnp.clip(jnp.exp(dist * g), 1e-5, 1e5)

        attn = msoftmax(scores * total_effect + bias)            # (S, S) f32
        # TODO(synk): nn.Dropout on the attention probabilities is omitted
        # (inference / eval semantics: identity).
        out_h = lax.dot_general(
            attn.astype(v.dtype), v, (((1,), (0,)), ((), ())),
            preferred_element_type=jnp.float32)                  # (S, d_k) f32
        outs.append(out_h)

    out = jnp.concatenate(outs, axis=-1)                         # (S, D) f32
    if zero_pad:
        # first query row replaced by zeros (torch.cat([pad_zero, scores[:,:,1:,:]]) @ v)
        rows = lax.broadcasted_iota(jnp.int32, (S, 1), 0)
        out = jnp.where(rows == 0, 0.0, out)
    o_ref[0] = out.astype(o_ref.dtype)


def pallas_akt_attention(qkv, keep, bias, pos, tri, gamma_neg, *, n_heads, d_k, zero_pad):
    """qkv: (B, S, 3D); keep/bias/pos/tri: (S, S); gamma_neg: (H,). Returns (B, S, D)."""
    B, S, D3 = qkv.shape
    D = n_heads * d_k
    kernel = functools.partial(
        _akt_attention_kernel,
        n_heads=n_heads, d_k=d_k, scale=1.0 / math.sqrt(d_k), zero_pad=zero_pad,
    )
    return pl.pallas_call(
        kernel,
        out_shape=jax.ShapeDtypeStruct((B, S, D), qkv.dtype),
        grid=(B,),
        in_specs=[
            pl.BlockSpec((1, S, D3), lambda b: (b, 0, 0)),           # fused q|k|v slab
            pl.BlockSpec((S, S), lambda b: (0, 0)),                  # keep (DMA'd once)
            pl.BlockSpec((S, S), lambda b: (0, 0)),                  # additive bias
            pl.BlockSpec((S, S), lambda b: (0, 0)),                  # |i-j|
            pl.BlockSpec((S, S), lambda b: (0, 0)),                  # strictly-lower ones
            pl.BlockSpec(memory_space=pltpu.MemorySpace.SMEM),       # gamma_neg (H,) scalars
        ],
        out_specs=pl.BlockSpec((1, S, D), lambda b: (b, 0, 0)),
        compiler_params=pltpu.CompilerParams(
            dimension_semantics=("parallel",),       # batch rows feed both TCs on v7x
            vmem_limit_bytes=_VMEM_LIMIT,
        ),
    )(qkv, keep, bias, pos, tri, gamma_neg)


# ---------------------------------------------------------------------------
# MultiHeadAttention forward (projections + attention + output projection)
# ---------------------------------------------------------------------------
def multi_head_attention_forward(params, q_in, k_in, v_in, mask, zero_pad, *,
                                 n_heads, d_k, kq_same):
    B, S, D = q_in.shape

    if kq_same:
        q_w, q_b = params["k_w"], params["k_b"]
    else:
        q_w, q_b = params["q_w"], params["q_b"]

    # Fused, row-tiled q/k/v projection -> (B, S, 3D) slab (no transposes, reshape is free).
    qkv = pallas_qkv_proj(
        q_in.reshape(B * S, D), k_in.reshape(B * S, D), v_in.reshape(B * S, D),
        q_w, params["k_w"], params["v_w"], q_b, params["k_b"], params["v_b"],
    ).reshape(B, S, 3 * D)

    # Attention constants, built once per call (tiny; each DMA'd to VMEM a single time).
    mask2d = mask.reshape(S, S)
    keep = (mask2d != 0).astype(jnp.float32)
    bias = jnp.where(mask2d == 0, jnp.float32(-1e32), jnp.float32(0.0))
    idx = jnp.arange(S, dtype=jnp.int32)
    pos = jnp.abs(idx[None, :] - idx[:, None]).astype(jnp.float32)   # |j - i|
    tri = (idx[:, None] > idx[None, :]).astype(jnp.bfloat16)         # tri[l, j] = (l > j)

    # gamma = -softplus(gammas): per-head scalars passed via SMEM (no (H,S,S) array).
    gamma_neg = (-jax.nn.softplus(params["gammas"].reshape(-1))).astype(jnp.float32)

    attn_out = pallas_akt_attention(
        qkv, keep, bias, pos, tri, gamma_neg,
        n_heads=n_heads, d_k=d_k, zero_pad=zero_pad,
    )                                                                # (B, S, D), head-concat

    out = pallas_linear(attn_out.reshape(B * S, D), params["out_w"], params["out_b"])
    return out.reshape(B, S, D)


def init_params(key, d_model, n_heads, kq_same):
    def xavier(k, shape, fan_in, fan_out):
        bound = math.sqrt(6.0 / (fan_in + fan_out))
        return jax.random.uniform(k, shape, jnp.float32, -bound, bound)

    keys = jax.random.split(key, 5)
    params = {
        "k_w": xavier(keys[0], (d_model, d_model), d_model, d_model),
        "k_b": jnp.zeros((d_model,), jnp.float32),
        "v_w": xavier(keys[1], (d_model, d_model), d_model, d_model),
        "v_b": jnp.zeros((d_model,), jnp.float32),
        "out_w": xavier(keys[2], (d_model, d_model), d_model, d_model),
        "out_b": jnp.zeros((d_model,), jnp.float32),
        # gammas ~ xavier_uniform on an (H, 1, 1) tensor: fan_in=1, fan_out=H
        "gammas": xavier(keys[3], (n_heads, 1, 1), 1, n_heads),
    }
    if not kq_same:
        params["q_w"] = xavier(keys[4], (d_model, d_model), d_model, d_model)
        params["q_b"] = jnp.zeros((d_model,), jnp.float32)
    return params


if __name__ == "__main__":
    d_model, n_heads = 32, 4
    d_k = d_model // n_heads
    kq_same = False
    B, S = 2, 8

    key = jax.random.PRNGKey(0)
    pkey, qkey, kkey, vkey = jax.random.split(key, 4)
    params = init_params(pkey, d_model, n_heads, kq_same)

    q = jax.random.normal(qkey, (B, S, d_model), jnp.float32)
    k = jax.random.normal(kkey, (B, S, d_model), jnp.float32)
    v = jax.random.normal(vkey, (B, S, d_model), jnp.float32)

    # causal mask (1 = attend), shape (1, 1, S, S), broadcast over batch & heads
    mask = jnp.tril(jnp.ones((S, S), jnp.float32)).reshape(1, 1, S, S)

    out = multi_head_attention_forward(
        params, q, k, v, mask, zero_pad=True,
        n_heads=n_heads, d_k=d_k, kq_same=kq_same,
    )
    jax.block_until_ready(out)
    assert out.shape == (B, S, d_model)
    print("KERNEL_OK")
</pallas_src>

<mosaic_0001>
module attributes {stable_mosaic.version = 11 : i64} {
  func.func @_qkv_proj_kernel(%arg0: i32, %arg1: memref<16x32xf32, #tpu.memory_space<vmem>>, %arg2: memref<16x32xf32, #tpu.memory_space<vmem>>, %arg3: memref<16x32xf32, #tpu.memory_space<vmem>>, %arg4: memref<32x32xf32, #tpu.memory_space<vmem>>, %arg5: memref<32x32xf32, #tpu.memory_space<vmem>>, %arg6: memref<32x32xf32, #tpu.memory_space<vmem>>, %arg7: memref<1x96xf32, #tpu.memory_space<vmem>>, %arg8: memref<16x96xf32, #tpu.memory_space<vmem>>) attributes {dimension_semantics = [#tpu.dimension_semantics<parallel>], iteration_bounds = array<i64: 1>, scalar_prefetch = 0 : i64, scratch_operands = 0 : i64, tpu.core_type = #tpu.core_type<tc>, window_params = [{transform_indices = @transform_0, window_bounds = array<i64: 16, 32>}, {transform_indices = @transform_1, window_bounds = array<i64: 16, 32>}, {transform_indices = @transform_2, window_bounds = array<i64: 16, 32>}, {pipeline_mode = #tpu.pipeline_mode<synchronous>, transform_indices = @transform_3, window_bounds = array<i64: 32, 32>}, {pipeline_mode = #tpu.pipeline_mode<synchronous>, transform_indices = @transform_4, window_bounds = array<i64: 32, 32>}, {pipeline_mode = #tpu.pipeline_mode<synchronous>, transform_indices = @transform_5, window_bounds = array<i64: 32, 32>}, {pipeline_mode = #tpu.pipeline_mode<synchronous>, transform_indices = @transform_6, window_bounds = array<i64: 1, 96>}, {transform_indices = @transform_7, window_bounds = array<i64: 16, 96>}]} {
    %c0 = arith.constant 0 : index
    %c0_0 = arith.constant 0 : index
    %0 = vector.load %arg1[%c0, %c0_0] : memref<16x32xf32, #tpu.memory_space<vmem>>, vector<16x32xf32>
    %c0_1 = arith.constant 0 : index
    %c0_2 = arith.constant 0 : index
    %1 = vector.load %arg4[%c0_1, %c0_2] : memref<32x32xf32, #tpu.memory_space<vmem>>, vector<32x32xf32>
    %cst = arith.constant dense<0.000000e+00> : vector<16x32xf32>
    %2 = tpu.matmul %0, %1, %cst {dimension_numbers = #tpu.dot_dimension_numbers<[1], [0], [0], [1], [0, 0, 1, 1], [], []>} : vector<16x32xf32>, vector<32x32xf32>, vector<16x32xf32> -> vector<16x32xf32>
    %c0_3 = arith.constant 0 : index
    %c0_4 = arith.constant 0 : index
    %3 = vector.load %arg2[%c0_3, %c0_4] : memref<16x32xf32, #tpu.memory_space<vmem>>, vector<16x32xf32>
    %c0_5 = arith.constant 0 : index
    %c0_6 = arith.constant 0 : index
    %4 = vector.load %arg5[%c0_5, %c0_6] : memref<32x32xf32, #tpu.memory_space<vmem>>, vector<32x32xf32>
    %cst_7 = arith.constant dense<0.000000e+00> : vector<16x32xf32>
    %5 = tpu.matmul %3, %4, %cst_7 {dimension_numbers = #tpu.dot_dimension_numbers<[1], [0], [0], [1], [0, 0, 1, 1], [], []>} : vector<16x32xf32>, vector<32x32xf32>, vector<16x32xf32> -> vector<16x32xf32>
    %c0_8 = arith.constant 0 : index
    %c0_9 = arith.constant 0 : index
    %6 = vector.load %arg3[%c0_8, %c0_9] : memref<16x32xf32, #tpu.memory_space<vmem>>, vector<16x32xf32>
    %c0_10 = arith.constant 0 : index
    %c0_11 = arith.constant 0 : index
    %7 = vector.load %arg6[%c0_10, %c0_11] : memref<32x32xf32, #tpu.memory_space<vmem>>, vector<32x32xf32>
    %cst_12 = arith.constant dense<0.000000e+00> : vector<16x32xf32>
    %8 = tpu.matmul %6, %7, %cst_12 {dimension_numbers = #tpu.dot_dimension_numbers<[1], [0], [0], [1], [0, 0, 1, 1], [], []>} : vector<16x32xf32>, vector<32x32xf32>, vector<16x32xf32> -> vector<16x32xf32>
    %9 = tpu.concatenate %2, %5, %8 in 1 : vector<16x32xf32>, vector<16x32xf32>, vector<16x32xf32> -> vector<16x96xf32>
    %c0_13 = arith.constant 0 : index
    %c0_14 = arith.constant 0 : index
    %10 = vector.load %arg7[%c0_13, %c0_14] : memref<1x96xf32, #tpu.memory_space<vmem>>, vector<1x96xf32>
    %11 = vector.broadcast %10 : vector<1x96xf32> to vector<16x96xf32>
    %12 = arith.addf %9, %11 : vector<16x96xf32>
    %c0_15 = arith.constant 0 : index
    %c0_16 = arith.constant 0 : index
    %13 = vector.load %arg8[%c0_15, %c0_16] : memref<16x96xf32, #tpu.memory_space<vmem>>, vector<16x96xf32>
    tpu.vector_store %arg8[%c0_15, %c0_16], %12 {strides = array<i32>} : memref<16x96xf32, #tpu.memory_space<vmem>>, vector<16x96xf32>,
    return
  }
  func.func @transform_0(%arg0: i32) -> (i32, i32) {
    %c0_i32 = arith.constant 0 : i32
    %c0_i32_0 = arith.constant 0 : i32
    return %arg0, %c0_i32 : i32, i32
  }
  func.func @transform_1(%arg0: i32) -> (i32, i32) {
    %c0_i32 = arith.constant 0 : i32
    %c0_i32_0 = arith.constant 0 : i32
    return %arg0, %c0_i32 : i32, i32
  }
  func.func @transform_2(%arg0: i32) -> (i32, i32) {
    %c0_i32 = arith.constant 0 : i32
    %c0_i32_0 = arith.constant 0 : i32
    return %arg0, %c0_i32 : i32, i32
  }
  func.func @transform_3(%arg0: i32) -> (i32, i32) {
    %c0_i32 = arith.constant 0 : i32
    %c0_i32_0 = arith.constant 0 : i32
    %c0_i32_1 = arith.constant 0 : i32
    return %c0_i32, %c0_i32_0 : i32, i32
  }
  func.func @transform_4(%arg0: i32) -> (i32, i32) {
    %c0_i32 = arith.constant 0 : i32
    %c0_i32_0 = arith.constant 0 : i32
    %c0_i32_1 = arith.constant 0 : i32
    return %c0_i32, %c0_i32_0 : i32, i32
  }
  func.func @transform_5(%arg0: i32) -> (i32, i32) {
    %c0_i32 = arith.constant 0 : i32
    %c0_i32_0 = arith.constant 0 : i32
    %c0_i32_1 = arith.constant 0 : i32
    return %c0_i32, %c0_i32_0 : i32, i32
  }
  func.func @transform_6(%arg0: i32) -> (i32, i32) {
    %c0_i32 = arith.constant 0 : i32
    %c0_i32_0 = arith.constant 0 : i32
    %c0_i32_1 = arith.constant 0 : i32
    return %c0_i32, %c0_i32_0 : i32, i32
  }
  func.func @transform_7(%arg0: i32) -> (i32, i32) {
    %c0_i32 = arith.constant 0 : i32
    %c0_i32_0 = arith.constant 0 : i32
    return %arg0, %c0_i32 : i32, i32
  }
}

</mosaic_0001>

<llo_original>
// kernel: tpu_custom_call.1
$region0: #{tpu_custom_call.1}
  #allocation0 [shape = 'u32[]', space=smem, size = 0x4, offset = 0x4, fixed_abs, tag = 'smem constant byte address 0x4 - core index']
  #allocation1 [shape = 'u32[144,128]{1,0:T(1,128)}', space=vmem, size = 0x12000, scoped, tag = 'internal scratch']
  %s0 = inlined_call_operand.hbm [shape: f32[16,32], index: 0, kind: input, shape index: {}]
  %s1 = inlined_call_operand.hbm [shape: f32[16,32], index: 1, kind: input, shape index: {}]
  %s2 = inlined_call_operand.hbm [shape: f32[16,32], index: 2, kind: input, shape index: {}]
  %s3 = inlined_call_operand.hbm [shape: f32[32,32], index: 3, kind: input, shape index: {}]
  %s4 = inlined_call_operand.hbm [shape: f32[32,32], index: 4, kind: input, shape index: {}]
  %s5 = inlined_call_operand.hbm [shape: f32[32,32], index: 5, kind: input, shape index: {}]
  %s6 = inlined_call_operand.hbm [shape: f32[1,96], index: 6, kind: input, shape index: {}]
  %s7 = inlined_call_operand.hbm [shape: f32[16,96], index: 7, kind: output, shape index: {}]
  %s8 = sld [smem:[#allocation0]]
  $region66: #{tpu_custom_call.1} parent=0
    _
  %s10 = ssub.s32 1, %s8
  %s11 = scalar_select 0, %s10, %s8
  $region1: #{tpu_custom_call.1} parent=0
    #allocation2 [shape = 'u8[8192]{0}', space=vmem, size = 0x2000, scoped, tag = 'input window, operand 0, single buffered']
    #allocation3 [shape = 's32[1]{0}', space=sflag, size = 0x4, scoped, tag = 'scoped memory for tpu_custom_call.1']
    #allocation4 [shape = 's32[1]{0}', space=sflag, size = 0x4, scoped, tag = 'scoped memory for tpu_custom_call.1']
    #allocation5 [shape = 'u8[8192]{0}', space=vmem, size = 0x2000, scoped, tag = 'input window, operand 1, single buffered']
    #allocation6 [shape = 's32[1]{0}', space=sflag, size = 0x4, scoped, tag = 'scoped memory for tpu_custom_call.1']
    #allocation7 [shape = 'u8[8192]{0}', space=vmem, size = 0x2000, scoped, tag = 'input window, operand 2, single buffered']
    #allocation8 [shape = 'u8[16384]{0}', space=vmem, size = 0x4000, scoped, tag = 'input window, operand 3, single buffered']
    #allocation9 [shape = 's32[1]{0}', space=sflag, size = 0x4, scoped, tag = 'scoped memory for tpu_custom_call.1']
    #allocation10 [shape = 'u8[16384]{0}', space=vmem, size = 0x4000, scoped, tag = 'input window, operand 4, single buffered']
    #allocation11 [shape = 'u8[16384]{0}', space=vmem, size = 0x4000, scoped, tag = 'input window, operand 5, single buffered']
    #allocation12 [shape = 's32[1]{0}', space=sflag, size = 0x4, scoped, tag = 'scoped memory for tpu_custom_call.1']
    #allocation13 [shape = 'u8[512]{0}', space=vmem, size = 0x400, scoped, tag = 'input window, operand 6, single buffered']
    #allocation14 [shape = 'u8[8192]{0}', space=vmem, size = 0x2000, scoped, tag = 'output window, operand 0, single buffered']
    %12 = vsyncpa [#allocation3], 0
    %13 = vsyncpa [#allocation6], 0
    %14 = vsyncpa [#allocation9], 0
    %15 = vsyncpa [#allocation12], 0
    %16 = vsyncpa [#allocation4], 0
    // Predicated region
    $region2: #{tpu_custom_call.1} parent=1 // pred_check
      _
    $region3: #{tpu_custom_call.1} parent=1 // pred_check_branch
      %18 = sbr.rel (0) target = $region5
    $region4: #{tpu_custom_call.1} parent=1 // pred_region
      %s20 = ssub.s32 256, 256
      %21 = vsyncadd [#allocation3], %s20
      %s22 = sshll.u32 [#allocation2], 4
      %s23 = int_to_ptr.vmem [resolvable:$true] %s22
      %28 = dma.hbm_to_vmem [thread:$0]  %s0, 256, %s23, [#allocation3], 128, 128, 8
    $region5: #{tpu_custom_call.1} parent=1 // pred_fallthru
      _
    // Predicated region
    $region6: #{tpu_custom_call.1} parent=1 // pred_check
      _
    $region7: #{tpu_custom_call.1} parent=1 // pred_check_branch
      %30 = sbr.rel (0) target = $region9
    $region8: #{tpu_custom_call.1} parent=1 // pred_region
      %s32 = ssub.s32 256, 256
      %33 = vsyncadd [#allocation6], %s32
      %s34 = sshll.u32 [#allocation5], 4
      %s35 = int_to_ptr.vmem [resolvable:$true] %s34
      %40 = dma.hbm_to_vmem [thread:$0]  %s1, 256, %s35, [#allocation6], 128, 128, 8
    $region9: #{tpu_custom_call.1} parent=1 // pred_fallthru
      _
    // Predicated region
    $region10: #{tpu_custom_call.1} parent=1 // pred_check
      _
    $region11: #{tpu_custom_call.1} parent=1 // pred_check_branch
      %42 = sbr.rel (0) target = $region13
    $region12: #{tpu_custom_call.1} parent=1 // pred_region
      %s44 = ssub.s32 256, 256
      %45 = vsyncadd [#allocation6], %s44
      %s46 = sshll.u32 [#allocation7], 4
      %s47 = int_to_ptr.vmem [resolvable:$true] %s46
      %52 = dma.hbm_to_vmem [thread:$0]  %s2, 256, %s47, [#allocation6], 128, 128, 8
    $region13: #{tpu_custom_call.1} parent=1 // pred_fallthru
      _
    // Predicated region
    $region14: #{tpu_custom_call.1} parent=1 // pred_check
      _
    $region15: #{tpu_custom_call.1} parent=1 // pred_check_branch
      %54 = sbr.rel (0) target = $region17
    $region16: #{tpu_custom_call.1} parent=1 // pred_region
      %s56 = ssub.s32 512, 512
      %57 = vsyncadd [#allocation9], %s56
      %s58 = sshll.u32 [#allocation8], 4
      %s59 = int_to_ptr.vmem [resolvable:$true] %s58
      %64 = dma.hbm_to_vmem [thread:$0]  %s3, 512, %s59, [#allocation9], 128, 128, 8
    $region17: #{tpu_custom_call.1} parent=1 // pred_fallthru
      _
    // Predicated region
    $region18: #{tpu_custom_call.1} parent=1 // pred_check
      _
    $region19: #{tpu_custom_call.1} parent=1 // pred_check_branch
      %66 = sbr.rel (0) target = $region21
    $region20: #{tpu_custom_call.1} parent=1 // pred_region
      %s68 = ssub.s32 512, 512
      %69 = vsyncadd [#allocation9], %s68
      %s70 = sshll.u32 [#allocation10], 4
      %s71 = int_to_ptr.vmem [resolvable:$true] %s70
      %76 = dma.hbm_to_vmem [thread:$0]  %s4, 512, %s71, [#allocation9], 128, 128, 8
    $region21: #{tpu_custom_call.1} parent=1 // pred_fallthru
      _
    // Predicated region
    $region22: #{tpu_custom_call.1} parent=1 // pred_check
      _
    $region23: #{tpu_custom_call.1} parent=1 // pred_check_branch
      %78 = sbr.rel (0) target = $region25
    $region24: #{tpu_custom_call.1} parent=1 // pred_region
      %s80 = ssub.s32 512, 512
      %81 = vsyncadd [#allocation12], %s80
      %s82 = sshll.u32 [#allocation11], 4
      %s83 = int_to_ptr.vmem [resolvable:$true] %s82
      %88 = dma.hbm_to_vmem [thread:$0]  %s5, 512, %s83, [#allocation12], 128, 128, 8
    $region25: #{tpu_custom_call.1} parent=1 // pred_fallthru
      _
    // Predicated region
    $region26: #{tpu_custom_call.1} parent=1 // pred_check
      _
    $region27: #{tpu_custom_call.1} parent=1 // pred_check_branch
      %90 = sbr.rel (0) target = $region29
    $region28: #{tpu_custom_call.1} parent=1 // pred_region
      %s92 = ssub.s32 16, 16
      %93 = vsyncadd [#allocation12], %s92
      %s95 = sshll.u32 [#allocation13], 4
      %s96 = int_to_ptr.vmem [resolvable:$true] %s95
      %98 = dma.hbm_to_vmem [thread:$0]  %s6, 16, %s96, [#allocation12]
    $region29: #{tpu_custom_call.1} parent=1 // pred_fallthru
      _
    // Predicated region
    $region30: #{tpu_custom_call.1} parent=1 // pred_check
      _
    $region31: #{tpu_custom_call.1} parent=1 // pred_check_branch
      %100 = sbr.rel (0) target = $region33
    $region32: #{tpu_custom_call.1} parent=1 // pred_region
      %101 = dma.done [#allocation3], 256
    $region33: #{tpu_custom_call.1} parent=1 // pred_fallthru
      _
    // Predicated region
    $region34: #{tpu_custom_call.1} parent=1 // pred_check
      _
    $region35: #{tpu_custom_call.1} parent=1 // pred_check_branch
      %103 = sbr.rel (0) target = $region37
    $region36: #{tpu_custom_call.1} parent=1 // pred_region
      %104 = dma.done [#allocation6], 256
    $region37: #{tpu_custom_call.1} parent=1 // pred_fallthru
      _
    // Predicated region
    $region38: #{tpu_custom_call.1} parent=1 // pred_check
      _
    $region39: #{tpu_custom_call.1} parent=1 // pred_check_branch
      %106 = sbr.rel (0) target = $region41
    $region40: #{tpu_custom_call.1} parent=1 // pred_region
      %107 = dma.done [#allocation6], 256
    $region41: #{tpu_custom_call.1} parent=1 // pred_fallthru
      _
    // Predicated region
    $region42: #{tpu_custom_call.1} parent=1 // pred_check
      _
    $region43: #{tpu_custom_call.1} parent=1 // pred_check_branch
      %109 = sbr.rel (0) target = $region45
    $region44: #{tpu_custom_call.1} parent=1 // pred_region
      %110 = dma.done [#allocation9], 512
    $region45: #{tpu_custom_call.1} parent=1 // pred_fallthru
      _
    // Predicated region
    $region46: #{tpu_custom_call.1} parent=1 // pred_check
      _
    $region47: #{tpu_custom_call.1} parent=1 // pred_check_branch
      %112 = sbr.rel (0) target = $region49
    $region48: #{tpu_custom_call.1} parent=1 // pred_region
      %113 = dma.done [#allocation9], 512
    $region49: #{tpu_custom_call.1} parent=1 // pred_fallthru
      _
    // Predicated region
    $region50: #{tpu_custom_call.1} parent=1 // pred_check
      _
    $region51: #{tpu_custom_call.1} parent=1 // pred_check_branch
      %115 = sbr.rel (0) target = $region53
    $region52: #{tpu_custom_call.1} parent=1 // pred_region
      %116 = dma.done [#allocation12], 512
    $region53: #{tpu_custom_call.1} parent=1 // pred_fallthru
      _
    // Predicated region
    $region54: #{tpu_custom_call.1} parent=1 // pred_check
      _
    $region55: #{tpu_custom_call.1} parent=1 // pred_check_branch
      %118 = sbr.rel (0) target = $region57
    $region56: #{tpu_custom_call.1} parent=1 // pred_region
      %119 = dma.done [#allocation12], 16
    $region57: #{tpu_custom_call.1} parent=1 // pred_fallthru
      _
    %v120 = vld [vmem:[#allocation2] sm:$0xff]
    %v121 = vld [vmem:[#allocation2 + $0x8] sm:$0xff]
    %v122 = vld [vmem:[#allocation8] sm:$0xff]
    %v123 = vld [vmem:[#allocation8 + $0x8] sm:$0xff]
    %v124 = vld [vmem:[#allocation8 + $0x10] sm:$0xff]
    %v125 = vld [vmem:[#allocation8 + $0x18] sm:$0xff]
    %vm126 = vcmask 261120
    %v128 = vsel %vm126, %v120, 0
    %v131 = vsel %vm126, %v121, 0
    %133 = vmatprep.subr.mxu0 0.0
    %134 = vmatpush1.msra.mxu0 %v122
    %135 = vmatprep.subr.mxu0 0.0
    %136 = vmatpush1.msra.mxu0 %v123
    %137 = vmatprep.subr.mxu0 0.0
    %138 = vmatpush1.msra.mxu0 %v124
    %139 = vmatprep.subr.mxu0 0.0
    %140 = vmatpush1.msra.mxu0 %v125
    %141 = vmatprep.subr.mxu0 0.0
    %142 = vmatpush1.msra.mxu0 0.0
    %143 = vmatprep.subr.mxu0 0.0
    %144 = vmatpush1.msra.mxu0 0.0
    %145 = vmatprep.subr.mxu0 0.0
    %146 = vmatpush1.msra.mxu0 0.0
    %147 = vmatprep.subr.mxu0 0.0
    %148 = vmatpush1.msra.mxu0 0.0
    %149 = vmatprep.subr.mxu0 0.0
    %150 = vmatpush1.msra.mxu0 0.0
    %151 = vmatprep.subr.mxu0 0.0
    %152 = vmatpush1.msra.mxu0 0.0
    %153 = vmatprep.subr.mxu0 0.0
    %154 = vmatpush1.msra.mxu0 0.0
    %155 = vmatprep.subr.mxu0 0.0
    %156 = vmatpush1.msra.mxu0 0.0
    %157 = vmatprep.subr.mxu0 0.0
    %158 = vmatpush1.msra.mxu0 0.0
    %159 = vmatprep.subr.mxu0 0.0
    %160 = vmatpush1.msra.mxu0 0.0
    %161 = vmatprep.subr.mxu0 0.0
    %162 = vmatpush1.msra.mxu0 0.0
    %163 = vmatprep.subr.mxu0 0.0
    %164 = vmatpush1.msra.mxu0 0.0
    %165 = vmatprep.subr.mxu0 0.0
    %166 = vmatpush1.msra.mxu0 0.0
    %167 = vmatprep.subr.mxu0 0.0
    %168 = vmatpush1.msra.mxu0 0.0
    %169 = vmatprep.subr.mxu0 0.0
    %170 = vmatpush1.msra.mxu0 0.0
    %171 = vmatprep.subr.mxu0 0.0
    %172 = vmatpush1.msra.mxu0 0.0
    %173 = vmatprep.subr.mxu0 0.0
    %174 = vmatpush1.msra.mxu0 0.0
    %175 = vmatprep.subr.mxu0 0.0
    %176 = vmatpush1.msra.mxu0 0.0
    %177 = vmatprep.subr.mxu0 0.0
    %178 = vmatpush1.msra.mxu0 0.0
    %179 = vmatprep.subr.mxu0 0.0
    %180 = vmatpush1.msra.mxu0 0.0
    %181 = vmatprep.subr.mxu0 0.0
    %182 = vmatpush1.msra.mxu0 0.0
    %183 = vmatprep.subr.mxu0 0.0
    %184 = vmatpush1.msra.mxu0 0.0
    %185 = vmatprep.subr.mxu0 0.0
    %186 = vmatpush1.msra.mxu0 0.0
    %187 = vmatprep.subr.mxu0 0.0
    %188 = vmatpush1.msra.mxu0 0.0
    %189 = vmatprep.subr.mxu0 0.0
    %190 = vmatpush1.msra.mxu0 0.0
    %191 = vmatprep.subr.mxu0 0.0
    %192 = vmatpush1.msra.mxu0 0.0
    %193 = vmatprep.subr.mxu0 0.0
    %194 = vmatpush1.msra.mxu0 0.0
    %195 = vmatprep.subr.mxu0 0.0
    %196 = vmatpush1.msra.mxu0 0.0
    %197 = vmatprep.mubr.f32.mxu0 0.0
    %198 = vmatmul.mubr.f32.gmra.mrb[0].mxu0 %v128
    %v199 = vpop.f32.mrb[0].mxu0
    %v200 = vadd.f32 0.0, %v199
    %v201 = vpop.f32.mrb[0].mxu0
    %202 = vmatprep.mubr.f32.mxu0 0.0
    %203 = vmatmul.mubr.f32.gmra.mrb[0].mxu0 %v131
    %v204 = vpop.f32.mrb[0].mxu0
    %v205 = vadd.f32 0.0, %v204
    %v206 = vpop.f32.mrb[0].mxu0
    %207 = vdwg.mxu0
    %v208 = vld [vmem:[#allocation5] sm:$0xff]
    %v209 = vld [vmem:[#allocation5 + $0x8] sm:$0xff]
    %v210 = vld [vmem:[#allocation10] sm:$0xff]
    %v211 = vld [vmem:[#allocation10 + $0x8] sm:$0xff]
    %v212 = vld [vmem:[#allocation10 + $0x10] sm:$0xff]
    %v213 = vld [vmem:[#allocation10 + $0x18] sm:$0xff]
    %v215 = vsel %vm126, %v208, 0
    %v218 = vsel %vm126, %v209, 0
    %220 = vmatprep.subr.mxu0 0.0
    %221 = vmatpush1.msra.mxu0 %v210
    %222 = vmatprep.subr.mxu0 0.0
    %223 = vmatpush1.msra.mxu0 %v211
    %224 = vmatprep.subr.mxu0 0.0
    %225 = vmatpush1.msra.mxu0 %v212
    %226 = vmatprep.subr.mxu0 0.0
    %227 = vmatpush1.msra.mxu0 %v213
    %228 = vmatprep.subr.mxu0 0.0
    %229 = vmatpush1.msra.mxu0 0.0
    %230 = vmatprep.subr.mxu0 0.0
    %231 = vmatpush1.msra.mxu0 0.0
    %232 = vmatprep.subr.mxu0 0.0
    %233 = vmatpush1.msra.mxu0 0.0
    %234 = vmatprep.subr.mxu0 0.0
    %235 = vmatpush1.msra.mxu0 0.0
    %236 = vmatprep.subr.mxu0 0.0
    %237 = vmatpush1.msra.mxu0 0.0
    %238 = vmatprep.subr.mxu0 0.0
    %239 = vmatpush1.msra.mxu0 0.0
    %240 = vmatprep.subr.mxu0 0.0
    %241 = vmatpush1.msra.mxu0 0.0
    %242 = vmatprep.subr.mxu0 0.0
    %243 = vmatpush1.msra.mxu0 0.0
    %244 = vmatprep.subr.mxu0 0.0
    %245 = vmatpush1.msra.mxu0 0.0
    %246 = vmatprep.subr.mxu0 0.0
    %247 = vmatpush1.msra.mxu0 0.0
    %248 = vmatprep.subr.mxu0 0.0
    %249 = vmatpush1.msra.mxu0 0.0
    %250 = vmatprep.subr.mxu0 0.0
    %251 = vmatpush1.msra.mxu0 0.0
    %252 = vmatprep.subr.mxu0 0.0
    %253 = vmatpush1.msra.mxu0 0.0
    %254 = vmatprep.subr.mxu0 0.0
    %255 = vmatpush1.msra.mxu0 0.0
    %256 = vmatprep.subr.mxu0 0.0
    %257 = vmatpush1.msra.mxu0 0.0
    %258 = vmatprep.subr.mxu0 0.0
    %259 = vmatpush1.msra.mxu0 0.0
    %260 = vmatprep.subr.mxu0 0.0
    %261 = vmatpush1.msra.mxu0 0.0
    %262 = vmatprep.subr.mxu0 0.0
    %263 = vmatpush1.msra.mxu0 0.0
    %264 = vmatprep.subr.mxu0 0.0
    %265 = vmatpush1.msra.mxu0 0.0
    %266 = vmatprep.subr.mxu0 0.0
    %267 = vmatpush1.msra.mxu0 0.0
    %268 = vmatprep.subr.mxu0 0.0
    %269 = vmatpush1.msra.mxu0 0.0
    %270 = vmatprep.subr.mxu0 0.0
    %271 = vmatpush1.msra.mxu0 0.0
    %272 = vmatprep.subr.mxu0 0.0
    %273 = vmatpush1.msra.mxu0 0.0
    %274 = vmatprep.subr.mxu0 0.0
    %275 = vmatpush1.msra.mxu0 0.0
    %276 = vmatprep.subr.mxu0 0.0
    %277 = vmatpush1.msra.mxu0 0.0
    %278 = vmatprep.subr.mxu0 0.0
    %279 = vmatpush1.msra.mxu0 0.0
    %280 = vmatprep.subr.mxu0 0.0
    %281 = vmatpush1.msra.mxu0 0.0
    %282 = vmatprep.subr.mxu0 0.0
    %283 = vmatpush1.msra.mxu0 0.0
    %284 = vmatprep.mubr.f32.mxu0 0.0
    %285 = vmatmul.mubr.f32.gmra.mrb[0].mxu0 %v215
    %v286 = vpop.f32.mrb[0].mxu0
    %v287 = vadd.f32 0.0, %v286
    %v288 = vpop.f32.mrb[0].mxu0
    %289 = vmatprep.mubr.f32.mxu0 0.0
    %290 = vmatmul.mubr.f32.gmra.mrb[0].mxu0 %v218
    %v291 = vpop.f32.mrb[0].mxu0
    %v292 = vadd.f32 0.0, %v291
    %v293 = vpop.f32.mrb[0].mxu0
    %294 = vdwg.mxu0
    %v295 = vld [vmem:[#allocation7] sm:$0xff]
    %v296 = vld [vmem:[#allocation7 + $0x8] sm:$0xff]
    %v297 = vld [vmem:[#allocation11] sm:$0xff]
    %v298 = vld [vmem:[#allocation11 + $0x8] sm:$0xff]
    %v299 = vld [vmem:[#allocation11 + $0x10] sm:$0xff]
    %v300 = vld [vmem:[#allocation11 + $0x18] sm:$0xff]
    %v302 = vsel %vm126, %v295, 0
    %v305 = vsel %vm126, %v296, 0
    %307 = vmatprep.subr.mxu0 0.0
    %308 = vmatpush1.msra.mxu0 %v297
    %309 = vmatprep.subr.mxu0 0.0
    %310 = vmatpush1.msra.mxu0 %v298
    %311 = vmatprep.subr.mxu0 0.0
    %312 = vmatpush1.msra.mxu0 %v299
    %313 = vmatprep.subr.mxu0 0.0
    %314 = vmatpush1.msra.mxu0 %v300
    %315 = vmatprep.subr.mxu0 0.0
    %316 = vmatpush1.msra.mxu0 0.0
    %317 = vmatprep.subr.mxu0 0.0
    %318 = vmatpush1.msra.mxu0 0.0
    %319 = vmatprep.subr.mxu0 0.0
    %320 = vmatpush1.msra.mxu0 0.0
    %321 = vmatprep.subr.mxu0 0.0
    %322 = vmatpush1.msra.mxu0 0.0
    %323 = vmatprep.subr.mxu0 0.0
    %324 = vmatpush1.msra.mxu0 0.0
    %325 = vmatprep.subr.mxu0 0.0
    %326 = vmatpush1.msra.mxu0 0.0
    %327 = vmatprep.subr.mxu0 0.0
    %328 = vmatpush1.msra.mxu0 0.0
    %329 = vmatprep.subr.mxu0 0.0
    %330 = vmatpush1.msra.mxu0 0.0
    %331 = vmatprep.subr.mxu0 0.0
    %332 = vmatpush1.msra.mxu0 0.0
    %333 = vmatprep.subr.mxu0 0.0
    %334 = vmatpush1.msra.mxu0 0.0
    %335 = vmatprep.subr.mxu0 0.0
    %336 = vmatpush1.msra.mxu0 0.0
    %337 = vmatprep.subr.mxu0 0.0
    %338 = vmatpush1.msra.mxu0 0.0
    %339 = vmatprep.subr.mxu0 0.0
    %340 = vmatpush1.msra.mxu0 0.0
    %341 = vmatprep.subr.mxu0 0.0
    %342 = vmatpush1.msra.mxu0 0.0
    %343 = vmatprep.subr.mxu0 0.0
    %344 = vmatpush1.msra.mxu0 0.0
    %345 = vmatprep.subr.mxu0 0.0
    %346 = vmatpush1.msra.mxu0 0.0
    %347 = vmatprep.subr.mxu0 0.0
    %348 = vmatpush1.msra.mxu0 0.0
    %349 = vmatprep.subr.mxu0 0.0
    %350 = vmatpush1.msra.mxu0 0.0
    %351 = vmatprep.subr.mxu0 0.0
    %352 = vmatpush1.msra.mxu0 0.0
    %353 = vmatprep.subr.mxu0 0.0
    %354 = vmatpush1.msra.mxu0 0.0
    %355 = vmatprep.subr.mxu0 0.0
    %356 = vmatpush1.msra.mxu0 0.0
    %357 = vmatprep.subr.mxu0 0.0
    %358 = vmatpush1.msra.mxu0 0.0
    %359 = vmatprep.subr.mxu0 0.0
    %360 = vmatpush1.msra.mxu0 0.0
    %361 = vmatprep.subr.mxu0 0.0
    %362 = vmatpush1.msra.mxu0 0.0
    %363 = vmatprep.subr.mxu0 0.0
    %364 = vmatpush1.msra.mxu0 0.0
    %365 = vmatprep.subr.mxu0 0.0
    %366 = vmatpush1.msra.mxu0 0.0
    %367 = vmatprep.subr.mxu0 0.0
    %368 = vmatpush1.msra.mxu0 0.0
    %369 = vmatprep.subr.mxu0 0.0
    %370 = vmatpush1.msra.mxu0 0.0
    %371 = vmatprep.mubr.f32.mxu0 0.0
    %372 = vmatmul.mubr.f32.gmra.mrb[0].mxu0 %v302
    %v373 = vpop.f32.mrb[0].mxu0
    %v374 = vadd.f32 0.0, %v373
    %v375 = vpop.f32.mrb[0].mxu0
    %376 = vmatprep.mubr.f32.mxu0 0.0
    %377 = vmatmul.mubr.f32.gmra.mrb[0].mxu0 %v305
    %v378 = vpop.f32.mrb[0].mxu0
    %v379 = vadd.f32 0.0, %v378
    %v380 = vpop.f32.mrb[0].mxu0
    %381 = vdwg.mxu0
    %384 = vrot.lane.b32.xlu0 %v287, 32
    %v385 = vpop.permute.xlu0 %384
    %386 = vrot.lane.b32.xlu0 %v292, 32
    %v387 = vpop.permute.xlu0 %386
    %392 = vrot.lane.b32.xlu0 %v374, 64
    %v393 = vpop.permute.xlu0 %392
    %394 = vrot.lane.b32.xlu0 %v379, 64
    %v395 = vpop.permute.xlu0 %394
    %v398 = vsel %vm126, %v200, %v385
    %v399 = vsel %vm126, %v205, %v387
    %vm400 = vcmask 523264
    %v401 = vsel %vm400, %v398, %v393
    %v402 = vsel %vm400, %v399, %v395
    %v403 = vld [vmem:[#allocation13] sm:$0x1]
    %v405 = vlaneseq
    %v406 = vshrl.u32 %v405, 7
    %v407 = vsub.s32 0, %v406
    %v408 = vrot.slane %v403, %v407
    %v410 = vadd.f32 %v401, %v408
    %v411 = vadd.f32 %v402, %v408
    %vm412 = vcmask 785408
    %413 = vst.msk [vmem:[#allocation14] sm:$0xff] %vm412, %v410
    %414 = vst.msk [vmem:[#allocation14 + $0x8] sm:$0xff] %vm412, %v411
    // Predicated region
    $region58: #{tpu_custom_call.1} parent=1 // pred_check
      _
    $region59: #{tpu_custom_call.1} parent=1 // pred_check_branch
      %416 = sbr.rel (0) target = $region61
    $region60: #{tpu_custom_call.1} parent=1 // pred_region
      %s418 = ssub.s32 256, 256
      %419 = vsyncadd [#allocation4], %s418
      %s420 = sshll.u32 [#allocation14], 4
      %s421 = int_to_ptr.vmem [resolvable:$true] %s420
      %426 = dma.vmem_to_hbm [thread:$0]  %s421, 256, %s7, [#allocation4], 128, 128, 8
    $region61: #{tpu_custom_call.1} parent=1 // pred_fallthru
      _
    // Predicated region
    $region62: #{tpu_custom_call.1} parent=1 // pred_check
      _
    $region63: #{tpu_custom_call.1} parent=1 // pred_check_branch
      %428 = sbr.rel (0) target = $region65
    $region64: #{tpu_custom_call.1} parent=1 // pred_region
      %429 = dma.done [#allocation4], 256
    $region65: #{tpu_custom_call.1} parent=1 // pred_fallthru
      _
    %430 = vsyncpa [#allocation3], 1
    %431 = vsyncpa [#allocation6], 1
    %432 = vsyncpa [#allocation9], 1
    %433 = vsyncpa [#allocation12], 1
    %434 = vsyncpa [#allocation4], 1

</llo_original>
